<compile_context>
chip_gen: v5e
topology: v5e:2x2
jax: 0.10.0
libtpu: 0.0.40
codegen_flags: <defaults>
</compile_context>

<pallas_src>
import functools

import jax
import jax.numpy as jnp
from jax.experimental import pallas as pl
from jax.experimental.pallas import tpu as pltpu


def _round_up(x, m):
    return ((x + m - 1) // m) * m


def _cbow_mean_kernel(x_ref, len_ref, o_ref, *, fold, rows_per_fold):
    # x_ref   : VMEM (TB, L, D)          current batch block
    # len_ref : VMEM (TB, 1) int32       per-row valid lengths
    # o_ref   : VMEM (TB // fold, fold*D) lane-dense folded output block
    L = x_ref.shape[1]
    pos = jax.lax.broadcasted_iota(jnp.int32, (rows_per_fold, L, 1), 1)

    pieces = []
    for j in range(fold):  # static, small unrolled loop (fold == 1 or 128 // D)
        lo = j * rows_per_fold
        hi = lo + rows_per_fold
        xj = x_ref[lo:hi, :, :].astype(jnp.float32)        # (rows, L, D) f32
        lj = len_ref[lo:hi, :]                             # (rows, 1) int32
        mask = pos < lj[:, None, :]                        # (rows, L, 1)
        summed = jnp.sum(jnp.where(mask, xj, 0.0), axis=1)  # (rows, D) f32
        # Reciprocal-multiply normalization. Clamp so padded / zero-length rows
        # produce 0 rather than inf.  (approx=True would push this onto the EUP,
        # but the divide is O(TB) scalars per O(TB*L*D) block and is not on the
        # critical path, so the exact form is kept for a tight self-check.)
        denom = jnp.maximum(lj, 1).astype(jnp.float32)      # (rows, 1)
        inv = pl.reciprocal(denom, approx=False)
        pieces.append(summed * inv)                         # (rows, D)

    out = pieces[0] if fold == 1 else jnp.concatenate(pieces, axis=-1)
    o_ref[...] = out.astype(o_ref.dtype)


def cbow_forward(inputs, lengths=None, pooling_type="mean", block_rows=None):
    """CBOW.forward: (batch, len, dim) -> (batch, dim) via masked mean pooling."""
    assert pooling_type == "mean", "only 'mean' pooling implemented"
    # TODO(synk): 'max' / 'sum' pooling variants of get_pooling not implemented.
    B, L, D = inputs.shape
    if lengths is None:
        lengths = jnp.full((B,), L, dtype=jnp.int32)
    lengths = lengths.astype(jnp.int32)

    # Fold factor so the output store is >= 128 lanes wide.
    if D % 128 == 0:
        fold = 1
    elif 128 % D == 0:
        fold = 128 // D
    else:
        fold = 1  # block last dim == full D is still legal, just not lane-dense

    itemsize = jnp.dtype(inputs.dtype).itemsize
    sublane = max(8, 32 // itemsize)          # 8 for f32, 16 for bf16
    unit = sublane * fold                     # keeps sublanes and lanes dense

    row_bytes = max(1, L * D * itemsize)
    if block_rows is None:
        tb = (2 * 1024 * 1024) // row_bytes   # ~2 MiB input block (x2 buffers)
    else:
        tb = block_rows
    tb = max(unit, (tb // unit) * unit)
    tb = min(tb, _round_up(B, unit))          # don't over-pad tiny batches
    # TODO(synk): for very large L*D (block >> VMEM target on v7x), add a second
    #             grid axis over D (TD multiple of 128) instead of shrinking TB.

    b_pad = _round_up(B, tb)
    num_blocks = b_pad // tb
    rows_per_fold = tb // fold

    if b_pad != B:
        inputs = jnp.pad(inputs, ((0, b_pad - B), (0, 0), (0, 0)))
        lengths = jnp.pad(lengths, (0, b_pad - B))
    lengths2d = lengths.reshape(b_pad, 1)

    kernel = functools.partial(
        _cbow_mean_kernel, fold=fold, rows_per_fold=rows_per_fold
    )

    folded = pl.pallas_call(
        kernel,
        out_shape=jax.ShapeDtypeStruct(
            (num_blocks * rows_per_fold, fold * D), inputs.dtype
        ),
        grid=(num_blocks,),
        in_specs=[
            pl.BlockSpec((tb, L, D), lambda b: (b, 0, 0)),
            pl.BlockSpec((tb, 1), lambda b: (b, 0)),
        ],
        out_specs=pl.BlockSpec((rows_per_fold, fold * D), lambda b: (b, 0)),
        compiler_params=pltpu.CompilerParams(
            dimension_semantics=("parallel",),       # independent batch blocks
            vmem_limit_bytes=48 * 1024 * 1024,       # > v5e/v6e defaults, < v7x 64 MiB
        ),
    )(inputs, lengths2d)

    # Un-fold (num_blocks*TBg, fold*D) -> (B, D): cheap layout plumbing on the
    # small output; inside the kernel this made the store a single dense vst.
    out = folded.reshape(num_blocks, rows_per_fold, fold, D)
    out = out.transpose(0, 2, 1, 3).reshape(b_pad, D)
    return out[:B]


if __name__ == "__main__":
    key = jax.random.PRNGKey(0)
    B, L, D = 2, 8, 32
    k1, k2 = jax.random.split(key)
    x = jax.random.normal(k1, (B, L, D), dtype=jnp.float32)
    lengths = jnp.array([8, 5], dtype=jnp.int32)

    out = cbow_forward(x, lengths)
    jax.block_until_ready(out)

    # pure-JAX reference (masked mean)
    pos = jnp.arange(L)[None, :, None]
    mask = pos < lengths[:, None, None]
    ref = jnp.sum(jnp.where(mask, x, 0.0), axis=1) / lengths[:, None].astype(x.dtype)
    assert out.shape == (B, D)
    assert jnp.allclose(out, ref, atol=1e-5, rtol=1e-5)

    # lengths=None path (plain mean over the seq dim)
    out2 = cbow_forward(x, None)
    jax.block_until_ready(out2)
    assert jnp.allclose(out2, jnp.mean(x, axis=1), atol=1e-5, rtol=1e-5)

    # bfloat16 inputs: halves HBM read traffic, f32 accumulation in-kernel
    xb = x.astype(jnp.bfloat16)
    out3 = cbow_forward(xb, lengths)
    jax.block_until_ready(out3)
    ref_b = jnp.sum(jnp.where(mask, xb.astype(jnp.float32), 0.0), axis=1)
    ref_b = ref_b / lengths[:, None].astype(jnp.float32)
    assert jnp.allclose(out3.astype(jnp.float32), ref_b, atol=2e-2, rtol=2e-2)

    # larger batch exercising multi-block grid + batch padding + un-fold
    B2 = 50
    x2 = jax.random.normal(k2, (B2, L, D), dtype=jnp.float32)
    len2 = (jnp.arange(B2, dtype=jnp.int32) % L) + 1
    out4 = cbow_forward(x2, len2, block_rows=32)
    jax.block_until_ready(out4)
    mask2 = jnp.arange(L)[None, :, None] < len2[:, None, None]
    ref4 = jnp.sum(jnp.where(mask2, x2, 0.0), axis=1) / len2[:, None].astype(x2.dtype)
    assert out4.shape == (B2, D)
    assert jnp.allclose(out4, ref4, atol=1e-5, rtol=1e-5)

    print("KERNEL_OK")
</pallas_src>

<mosaic_0001>
module attributes {stable_mosaic.version = 11 : i64} {
  func.func @_cbow_mean_kernel(%arg0: i32, %arg1: memref<32x8x32xf32, #tpu.memory_space<vmem>>, %arg2: memref<32x1xi32, #tpu.memory_space<vmem>>, %arg3: memref<8x128xf32, #tpu.memory_space<vmem>>) attributes {dimension_semantics = [#tpu.dimension_semantics<parallel>], iteration_bounds = array<i64: 1>, scalar_prefetch = 0 : i64, scratch_operands = 0 : i64, tpu.core_type = #tpu.core_type<tc>, window_params = [{transform_indices = @transform_0, window_bounds = array<i64: 32, 8, 32>}, {transform_indices = @transform_1, window_bounds = array<i64: 32, 1>}, {transform_indices = @transform_2, window_bounds = array<i64: 8, 128>}]} {
    %0 = tpu.iota {dimensions = array<i32: 1>} : vector<8x8x1xi32>
    %c0 = arith.constant 0 : index
    %c0_0 = arith.constant 0 : index
    %c0_1 = arith.constant 0 : index
    %1 = vector.load %arg1[%c0, %c0_0, %c0_1] : memref<32x8x32xf32, #tpu.memory_space<vmem>>, vector<8x8x32xf32>
    %c0_2 = arith.constant 0 : index
    %c0_3 = arith.constant 0 : index
    %2 = vector.load %arg2[%c0_2, %c0_3] : memref<32x1xi32, #tpu.memory_space<vmem>>, vector<8x1xi32>
    %3 = vector.shape_cast %2 : vector<8x1xi32> to vector<8x1x1xi32>
    %4 = vector.broadcast %3 : vector<8x1x1xi32> to vector<8x8x1xi32>
    %5 = arith.cmpi slt, %0, %4 : vector<8x8x1xi32>
    %cst = arith.constant 0.000000e+00 : f32
    %6 = vector.shape_cast %5 : vector<8x8x1xi1> to vector<8x8x1xi1>
    %7 = vector.broadcast %6 : vector<8x8x1xi1> to vector<8x8x32xi1>
    %8 = vector.broadcast %cst : f32 to vector<8x8x32xf32>
    %9 = arith.select %7, %1, %8 : vector<8x8x32xi1>, vector<8x8x32xf32>
    %cst_4 = arith.constant dense<0.000000e+00> : vector<8x32xf32>
    %10 = vector.multi_reduction <add>, %9, %cst_4 [1] : vector<8x8x32xf32> to vector<8x32xf32>
    %c1_i32 = arith.constant 1 : i32
    %11 = vector.broadcast %c1_i32 : i32 to vector<8x1xi32>
    %12 = arith.maxsi %2, %11 : vector<8x1xi32>
    %13 = arith.sitofp %12 : vector<8x1xi32> to vector<8x1xf32>
    %14 = tpu.reciprocal %13 : vector<8x1xf32> -> vector<8x1xf32>
    %15 = vector.broadcast %14 : vector<8x1xf32> to vector<8x32xf32>
    %16 = arith.mulf %10, %15 : vector<8x32xf32>
    %c8 = arith.constant 8 : index
    %c0_5 = arith.constant 0 : index
    %c0_6 = arith.constant 0 : index
    %17 = vector.load %arg1[%c8, %c0_5, %c0_6] : memref<32x8x32xf32, #tpu.memory_space<vmem>>, vector<8x8x32xf32>
    %c8_7 = arith.constant 8 : index
    %c0_8 = arith.constant 0 : index
    %18 = vector.load %arg2[%c8_7, %c0_8] : memref<32x1xi32, #tpu.memory_space<vmem>>, vector<8x1xi32>
    %19 = vector.shape_cast %18 : vector<8x1xi32> to vector<8x1x1xi32>
    %20 = vector.broadcast %19 : vector<8x1x1xi32> to vector<8x8x1xi32>
    %21 = arith.cmpi slt, %0, %20 : vector<8x8x1xi32>
    %cst_9 = arith.constant 0.000000e+00 : f32
    %22 = vector.shape_cast %21 : vector<8x8x1xi1> to vector<8x8x1xi1>
    %23 = vector.broadcast %22 : vector<8x8x1xi1> to vector<8x8x32xi1>
    %24 = vector.broadcast %cst_9 : f32 to vector<8x8x32xf32>
    %25 = arith.select %23, %17, %24 : vector<8x8x32xi1>, vector<8x8x32xf32>
    %cst_10 = arith.constant dense<0.000000e+00> : vector<8x32xf32>
    %26 = vector.multi_reduction <add>, %25, %cst_10 [1] : vector<8x8x32xf32> to vector<8x32xf32>
    %c1_i32_11 = arith.constant 1 : i32
    %27 = vector.broadcast %c1_i32_11 : i32 to vector<8x1xi32>
    %28 = arith.maxsi %18, %27 : vector<8x1xi32>
    %29 = arith.sitofp %28 : vector<8x1xi32> to vector<8x1xf32>
    %30 = tpu.reciprocal %29 : vector<8x1xf32> -> vector<8x1xf32>
    %31 = vector.broadcast %30 : vector<8x1xf32> to vector<8x32xf32>
    %32 = arith.mulf %26, %31 : vector<8x32xf32>
    %c16 = arith.constant 16 : index
    %c0_12 = arith.constant 0 : index
    %c0_13 = arith.constant 0 : index
    %33 = vector.load %arg1[%c16, %c0_12, %c0_13] : memref<32x8x32xf32, #tpu.memory_space<vmem>>, vector<8x8x32xf32>
    %c16_14 = arith.constant 16 : index
    %c0_15 = arith.constant 0 : index
    %34 = vector.load %arg2[%c16_14, %c0_15] : memref<32x1xi32, #tpu.memory_space<vmem>>, vector<8x1xi32>
    %35 = vector.shape_cast %34 : vector<8x1xi32> to vector<8x1x1xi32>
    %36 = vector.broadcast %35 : vector<8x1x1xi32> to vector<8x8x1xi32>
    %37 = arith.cmpi slt, %0, %36 : vector<8x8x1xi32>
    %cst_16 = arith.constant 0.000000e+00 : f32
    %38 = vector.shape_cast %37 : vector<8x8x1xi1> to vector<8x8x1xi1>
    %39 = vector.broadcast %38 : vector<8x8x1xi1> to vector<8x8x32xi1>
    %40 = vector.broadcast %cst_16 : f32 to vector<8x8x32xf32>
    %41 = arith.select %39, %33, %40 : vector<8x8x32xi1>, vector<8x8x32xf32>
    %cst_17 = arith.constant dense<0.000000e+00> : vector<8x32xf32>
    %42 = vector.multi_reduction <add>, %41, %cst_17 [1] : vector<8x8x32xf32> to vector<8x32xf32>
    %c1_i32_18 = arith.constant 1 : i32
    %43 = vector.broadcast %c1_i32_18 : i32 to vector<8x1xi32>
    %44 = arith.maxsi %34, %43 : vector<8x1xi32>
    %45 = arith.sitofp %44 : vector<8x1xi32> to vector<8x1xf32>
    %46 = tpu.reciprocal %45 : vector<8x1xf32> -> vector<8x1xf32>
    %47 = vector.broadcast %46 : vector<8x1xf32> to vector<8x32xf32>
    %48 = arith.mulf %42, %47 : vector<8x32xf32>
    %c24 = arith.constant 24 : index
    %c0_19 = arith.constant 0 : index
    %c0_20 = arith.constant 0 : index
    %49 = vector.load %arg1[%c24, %c0_19, %c0_20] : memref<32x8x32xf32, #tpu.memory_space<vmem>>, vector<8x8x32xf32>
    %c24_21 = arith.constant 24 : index
    %c0_22 = arith.constant 0 : index
    %50 = vector.load %arg2[%c24_21, %c0_22] : memref<32x1xi32, #tpu.memory_space<vmem>>, vector<8x1xi32>
    %51 = vector.shape_cast %50 : vector<8x1xi32> to vector<8x1x1xi32>
    %52 = vector.broadcast %51 : vector<8x1x1xi32> to vector<8x8x1xi32>
    %53 = arith.cmpi slt, %0, %52 : vector<8x8x1xi32>
    %cst_23 = arith.constant 0.000000e+00 : f32
    %54 = vector.shape_cast %53 : vector<8x8x1xi1> to vector<8x8x1xi1>
    %55 = vector.broadcast %54 : vector<8x8x1xi1> to vector<8x8x32xi1>
    %56 = vector.broadcast %cst_23 : f32 to vector<8x8x32xf32>
    %57 = arith.select %55, %49, %56 : vector<8x8x32xi1>, vector<8x8x32xf32>
    %cst_24 = arith.constant dense<0.000000e+00> : vector<8x32xf32>
    %58 = vector.multi_reduction <add>, %57, %cst_24 [1] : vector<8x8x32xf32> to vector<8x32xf32>
    %c1_i32_25 = arith.constant 1 : i32
    %59 = vector.broadcast %c1_i32_25 : i32 to vector<8x1xi32>
    %60 = arith.maxsi %50, %59 : vector<8x1xi32>
    %61 = arith.sitofp %60 : vector<8x1xi32> to vector<8x1xf32>
    %62 = tpu.reciprocal %61 : vector<8x1xf32> -> vector<8x1xf32>
    %63 = vector.broadcast %62 : vector<8x1xf32> to vector<8x32xf32>
    %64 = arith.mulf %58, %63 : vector<8x32xf32>
    %65 = tpu.concatenate %16, %32, %48, %64 in 1 : vector<8x32xf32>, vector<8x32xf32>, vector<8x32xf32>, vector<8x32xf32> -> vector<8x128xf32>
    %c0_26 = arith.constant 0 : index
    %c0_27 = arith.constant 0 : index
    %66 = vector.load %arg3[%c0_26, %c0_27] : memref<8x128xf32, #tpu.memory_space<vmem>>, vector<8x128xf32>
    tpu.vector_store %arg3[%c0_26, %c0_27], %65 {strides = array<i32>} : memref<8x128xf32, #tpu.memory_space<vmem>>, vector<8x128xf32>,
    return
  }
  func.func @transform_0(%arg0: i32) -> (i32, i32, i32) {
    %c0_i32 = arith.constant 0 : i32
    %c0_i32_0 = arith.constant 0 : i32
    %c0_i32_1 = arith.constant 0 : i32
    return %arg0, %c0_i32, %c0_i32_0 : i32, i32, i32
  }
  func.func @transform_1(%arg0: i32) -> (i32, i32) {
    %c0_i32 = arith.constant 0 : i32
    %c0_i32_0 = arith.constant 0 : i32
    return %arg0, %c0_i32 : i32, i32
  }
  func.func @transform_2(%arg0: i32) -> (i32, i32) {
    %c0_i32 = arith.constant 0 : i32
    %c0_i32_0 = arith.constant 0 : i32
    return %arg0, %c0_i32 : i32, i32
  }
}

</mosaic_0001>

<llo_original>
// kernel: tpu_custom_call.1
$region0: #{tpu_custom_call.1}
  #allocation0 [shape = 'u32[]', space=smem, size = 0x4, offset = 0x4, fixed_abs, tag = 'smem constant byte address 0x4 - core index']
  #allocation1 [shape = 'u32[72,128]{1,0:T(1,128)}', space=vmem, size = 0x9000, scoped, tag = 'internal scratch']
  %s0 = inlined_call_operand.hbm [shape: f32[32,8,32], index: 0, kind: input, shape index: {}]
  %s1 = inlined_call_operand.vmem [shape: s32[32,1], index: 1, kind: input, shape index: {}]
  %s2 = inlined_call_operand.hbm [shape: f32[8,128], index: 2, kind: output, shape index: {}]
  %s3 = sld [smem:[#allocation0]]
  $region22: #{tpu_custom_call.1} parent=0
    _
  %s5 = ssub.s32 1, %s3
  %s6 = scalar_select 0, %s5, %s3
  $region1: #{tpu_custom_call.1} parent=0
    #allocation2 [shape = 'u8[131072]{0}', space=vmem, size = 0x20000, scoped, tag = 'input window, operand 0, single buffered']
    #allocation3 [shape = 's32[1]{0}', space=sflag, size = 0x4, scoped, tag = 'scoped memory for tpu_custom_call.1']
    #allocation4 [shape = 's32[1]{0}', space=sflag, size = 0x4, scoped, tag = 'scoped memory for tpu_custom_call.1']
    #allocation5 [shape = 'u8[4096]{0}', space=vmem, size = 0x1000, scoped, tag = 'output window, operand 0, single buffered']
    %7 = vsyncpa [#allocation3], 0
    %8 = vsyncpa [#allocation4], 0
    // Predicated region
    $region2: #{tpu_custom_call.1} parent=1 // pred_check
      _
    $region3: #{tpu_custom_call.1} parent=1 // pred_check_branch
      %10 = sbr.rel (0) target = $region5
    $region4: #{tpu_custom_call.1} parent=1 // pred_region
      %12 = vsyncadd [#allocation3], 0
      %s13 = sshll.u32 %s0, 4
      %s14 = int_to_ptr.hbm [resolvable:$true] %s13
      %s15 = sshll.u32 [#allocation2], 4
      %s16 = int_to_ptr.vmem [resolvable:$true] %s15
      %21 = dma.hbm_to_vmem [thread:$0]  %s14, 4096, %s16, [#allocation3], 128, 128, 8
    $region5: #{tpu_custom_call.1} parent=1 // pred_fallthru
      _
    // Predicated region
    $region6: #{tpu_custom_call.1} parent=1 // pred_check
      _
    $region7: #{tpu_custom_call.1} parent=1 // pred_check_branch
      %23 = sbr.rel (0) target = $region9
    $region8: #{tpu_custom_call.1} parent=1 // pred_region
      _
    $region9: #{tpu_custom_call.1} parent=1 // pred_fallthru
      _
    // Predicated region
    $region10: #{tpu_custom_call.1} parent=1 // pred_check
      _
    $region11: #{tpu_custom_call.1} parent=1 // pred_check_branch
      %25 = sbr.rel (0) target = $region13
    $region12: #{tpu_custom_call.1} parent=1 // pred_region
      %27 = dma.done [#allocation3], 4096
    $region13: #{tpu_custom_call.1} parent=1 // pred_fallthru
      _
    %v28 = vlaneseq
    %v29 = vshrl.u32 %v28, 7
    %v30 = vld [vmem:[#allocation2] sm:$0xff]
    %v31 = vld [vmem:[#allocation2 + $0x8] sm:$0xff]
    %v32 = vld [vmem:[#allocation2 + $0x10] sm:$0xff]
    %v33 = vld [vmem:[#allocation2 + $0x18] sm:$0xff]
    %v34 = vld [vmem:[#allocation2 + $0x20] sm:$0xff]
    %v35 = vld [vmem:[#allocation2 + $0x28] sm:$0xff]
    %v36 = vld [vmem:[#allocation2 + $0x30] sm:$0xff]
    %v37 = vld [vmem:[#allocation2 + $0x38] sm:$0xff]
    %v38 = vld [vmem:[%s1] sm:$0xff]
    %v39 = vrot.slane %v38, 1
    %v40 = vrot.slane %v38, 2
    %v41 = vrot.slane %v38, 3
    %v42 = vrot.slane %v38, 4
    %v43 = vrot.slane %v38, 5
    %v44 = vrot.slane %v38, 6
    %v45 = vrot.slane %v38, 7
    %v46 = vperm.slane %v38, 0
    %v47 = vperm.slane %v39, 0
    %v48 = vperm.slane %v40, 0
    %v49 = vperm.slane %v41, 0
    %v50 = vperm.slane %v42, 0
    %v51 = vperm.slane %v43, 0
    %v52 = vperm.slane %v44, 0
    %v53 = vperm.slane %v45, 0
    %vm54 = vcmp.lt.s32.totalorder %v29, %v46
    %vm55 = vcmp.lt.s32.totalorder %v29, %v47
    %vm56 = vcmp.lt.s32.totalorder %v29, %v48
    %vm57 = vcmp.lt.s32.totalorder %v29, %v49
    %vm58 = vcmp.lt.s32.totalorder %v29, %v50
    %vm59 = vcmp.lt.s32.totalorder %v29, %v51
    %vm60 = vcmp.lt.s32.totalorder %v29, %v52
    %vm61 = vcmp.lt.s32.totalorder %v29, %v53
    %v62 = vsel %vm54, 1, 0
    %v63 = vsel %vm55, 1, 0
    %v64 = vsel %vm56, 1, 0
    %v65 = vsel %vm57, 1, 0
    %v66 = vsel %vm58, 1, 0
    %v67 = vsel %vm59, 1, 0
    %v68 = vsel %vm60, 1, 0
    %v69 = vsel %vm61, 1, 0
    %70 = vset.pattern.permute.xlu0 0
    %71 = vperm.xlu0 %70, %v62
    %v72 = vpop.permute.xlu0 %71
    %73 = vset.pattern.permute.xlu0 0
    %74 = vperm.xlu0 %73, %v63
    %v75 = vpop.permute.xlu0 %74
    %76 = vset.pattern.permute.xlu0 0
    %77 = vperm.xlu0 %76, %v64
    %v78 = vpop.permute.xlu0 %77
    %79 = vset.pattern.permute.xlu0 0
    %80 = vperm.xlu0 %79, %v65
    %v81 = vpop.permute.xlu0 %80
    %82 = vset.pattern.permute.xlu0 0
    %83 = vperm.xlu0 %82, %v66
    %v84 = vpop.permute.xlu0 %83
    %85 = vset.pattern.permute.xlu0 0
    %86 = vperm.xlu0 %85, %v67
    %v87 = vpop.permute.xlu0 %86
    %88 = vset.pattern.permute.xlu0 0
    %89 = vperm.xlu0 %88, %v68
    %v90 = vpop.permute.xlu0 %89
    %91 = vset.pattern.permute.xlu0 0
    %92 = vperm.xlu0 %91, %v69
    %v93 = vpop.permute.xlu0 %92
    %vm94 = vcmp.eq.s32.totalorder %v72, 1
    %vm95 = vcmp.eq.s32.totalorder %v75, 1
    %vm96 = vcmp.eq.s32.totalorder %v78, 1
    %vm97 = vcmp.eq.s32.totalorder %v81, 1
    %vm98 = vcmp.eq.s32.totalorder %v84, 1
    %vm99 = vcmp.eq.s32.totalorder %v87, 1
    %vm100 = vcmp.eq.s32.totalorder %v90, 1
    %vm101 = vcmp.eq.s32.totalorder %v93, 1
    %v102 = vsel %vm94, %v30, 0.0
    %v103 = vsel %vm95, %v31, 0.0
    %v104 = vsel %vm96, %v32, 0.0
    %v105 = vsel %vm97, %v33, 0.0
    %v106 = vsel %vm98, %v34, 0.0
    %v107 = vsel %vm99, %v35, 0.0
    %v108 = vsel %vm100, %v36, 0.0
    %v109 = vsel %vm101, %v37, 0.0
    %vm110 = vcmask 261120
    %v111 = vsel %vm110, %v102, 0.0
    %v112 = vrot.slane %v111, 4
    %v113 = vadd.f32 %v111, %v112
    %v114 = vrot.slane %v113, 2
    %v115 = vadd.f32 %v113, %v114
    %v116 = vrot.slane %v115, 1
    %v117 = vadd.f32 %v115, %v116
    %v118 = vsel %vm110, %v103, 0.0
    %v119 = vrot.slane %v118, 4
    %v120 = vadd.f32 %v118, %v119
    %v121 = vrot.slane %v120, 2
    %v122 = vadd.f32 %v120, %v121
    %v123 = vrot.slane %v122, 1
    %v124 = vadd.f32 %v122, %v123
    %v125 = vsel %vm110, %v104, 0.0
    %v126 = vrot.slane %v125, 4
    %v127 = vadd.f32 %v125, %v126
    %v128 = vrot.slane %v127, 2
    %v129 = vadd.f32 %v127, %v128
    %v130 = vrot.slane %v129, 1
    %v131 = vadd.f32 %v129, %v130
    %v132 = vsel %vm110, %v105, 0.0
    %v133 = vrot.slane %v132, 4
    %v134 = vadd.f32 %v132, %v133
    %v135 = vrot.slane %v134, 2
    %v136 = vadd.f32 %v134, %v135
    %v137 = vrot.slane %v136, 1
    %v138 = vadd.f32 %v136, %v137
    %v139 = vsel %vm110, %v106, 0.0
    %v140 = vrot.slane %v139, 4
    %v141 = vadd.f32 %v139, %v140
    %v142 = vrot.slane %v141, 2
    %v143 = vadd.f32 %v141, %v142
    %v144 = vrot.slane %v143, 1
    %v145 = vadd.f32 %v143, %v144
    %v146 = vsel %vm110, %v107, 0.0
    %v147 = vrot.slane %v146, 4
    %v148 = vadd.f32 %v146, %v147
    %v149 = vrot.slane %v148, 2
    %v150 = vadd.f32 %v148, %v149
    %v151 = vrot.slane %v150, 1
    %v152 = vadd.f32 %v150, %v151
    %v153 = vsel %vm110, %v108, 0.0
    %v154 = vrot.slane %v153, 4
    %v155 = vadd.f32 %v153, %v154
    %v156 = vrot.slane %v155, 2
    %v157 = vadd.f32 %v155, %v156
    %v158 = vrot.slane %v157, 1
    %v159 = vadd.f32 %v157, %v158
    %v160 = vsel %vm110, %v109, 0.0
    %v161 = vrot.slane %v160, 4
    %v162 = vadd.f32 %v160, %v161
    %v163 = vrot.slane %v162, 2
    %v164 = vadd.f32 %v162, %v163
    %v165 = vrot.slane %v164, 1
    %v166 = vadd.f32 %v164, %v165
    %vm167 = vcmp.gt.s32.totalorder %v38, 1
    %v168 = vsel %vm167, %v38, 1
    %v169 = vcvt.s32.f32 %v168
    %v170 = vrcp.pop %v169
    %v171 = vmul.f32 %v169, %v170
    %v172 = vsub.f32 1.0, %v171
    %v173 = vmul.f32 %v170, %v172
    %v174 = vadd.f32 %v170, %v173
    %vm175 = vweird.f32 %v169
    %vm176 = vweird.f32 %v170
    %vm177 = vmor %vm175, %vm176
    %v178 = vsel %vm177, %v170, %v174
    %v179 = vand.u32 2147483647, %v169
    %vm180 = vcmp.eq.f32.partialorder %v179, 8.507059e+37
    %v181 = vand.u32 %v169, 2147483648
    %v182 = vor.u32 1.1754944e-38, %v181
    %v183 = vsel %vm180, %v182, %v178
    %185 = vset.pattern.permute.xlu0 0
    %186 = vperm.xlu0 %185, %v183
    %v187 = vpop.permute.xlu0 %186
    %v188 = vrot.slane %v187, 1
    %v189 = vrot.slane %v187, 2
    %v190 = vrot.slane %v187, 3
    %v191 = vrot.slane %v187, 4
    %v192 = vrot.slane %v187, 5
    %v193 = vrot.slane %v187, 6
    %v194 = vrot.slane %v187, 7
    %v203 = vmul.f32 %v117, %v187
    %v204 = vmul.f32 %v124, %v188
    %v205 = vmul.f32 %v131, %v189
    %v206 = vmul.f32 %v138, %v190
    %v207 = vmul.f32 %v145, %v191
    %v208 = vmul.f32 %v152, %v192
    %v209 = vmul.f32 %v159, %v193
    %v210 = vmul.f32 %v166, %v194
    %s211 = scalar_lea.vmem [#allocation2], 64
    %v212 = vld [vmem:[%s211] sm:$0xff]
    %v213 = vld [vmem:[%s211 + $0x8] sm:$0xff]
    %v214 = vld [vmem:[%s211 + $0x10] sm:$0xff]
    %v215 = vld [vmem:[%s211 + $0x18] sm:$0xff]
    %v216 = vld [vmem:[%s211 + $0x20] sm:$0xff]
    %v217 = vld [vmem:[%s211 + $0x28] sm:$0xff]
    %v218 = vld [vmem:[%s211 + $0x30] sm:$0xff]
    %v219 = vld [vmem:[%s211 + $0x38] sm:$0xff]
    %v220 = vld [vmem:[%s1 + $0x8] sm:$0xff]
    %v221 = vrot.slane %v220, 1
    %v222 = vrot.slane %v220, 2
    %v223 = vrot.slane %v220, 3
    %v224 = vrot.slane %v220, 4
    %v225 = vrot.slane %v220, 5
    %v226 = vrot.slane %v220, 6
    %v227 = vrot.slane %v220, 7
    %v228 = vperm.slane %v220, 0
    %v229 = vperm.slane %v221, 0
    %v230 = vperm.slane %v222, 0
    %v231 = vperm.slane %v223, 0
    %v232 = vperm.slane %v224, 0
    %v233 = vperm.slane %v225, 0
    %v234 = vperm.slane %v226, 0
    %v235 = vperm.slane %v227, 0
    %vm236 = vcmp.lt.s32.totalorder %v29, %v228
    %vm237 = vcmp.lt.s32.totalorder %v29, %v229
    %vm238 = vcmp.lt.s32.totalorder %v29, %v230
    %vm239 = vcmp.lt.s32.totalorder %v29, %v231
    %vm240 = vcmp.lt.s32.totalorder %v29, %v232
    %vm241 = vcmp.lt.s32.totalorder %v29, %v233
    %vm242 = vcmp.lt.s32.totalorder %v29, %v234
    %vm243 = vcmp.lt.s32.totalorder %v29, %v235
    %v244 = vsel %vm236, 1, 0
    %v245 = vsel %vm237, 1, 0
    %v246 = vsel %vm238, 1, 0
    %v247 = vsel %vm239, 1, 0
    %v248 = vsel %vm240, 1, 0
    %v249 = vsel %vm241, 1, 0
    %v250 = vsel %vm242, 1, 0
    %v251 = vsel %vm243, 1, 0
    %252 = vset.pattern.permute.xlu0 0
    %253 = vperm.xlu0 %252, %v244
    %v254 = vpop.permute.xlu0 %253
    %255 = vset.pattern.permute.xlu0 0
    %256 = vperm.xlu0 %255, %v245
    %v257 = vpop.permute.xlu0 %256
    %258 = vset.pattern.permute.xlu0 0
    %259 = vperm.xlu0 %258, %v246
    %v260 = vpop.permute.xlu0 %259
    %261 = vset.pattern.permute.xlu0 0
    %262 = vperm.xlu0 %261, %v247
    %v263 = vpop.permute.xlu0 %262
    %264 = vset.pattern.permute.xlu0 0
    %265 = vperm.xlu0 %264, %v248
    %v266 = vpop.permute.xlu0 %265
    %267 = vset.pattern.permute.xlu0 0
    %268 = vperm.xlu0 %267, %v249
    %v269 = vpop.permute.xlu0 %268
    %270 = vset.pattern.permute.xlu0 0
    %271 = vperm.xlu0 %270, %v250
    %v272 = vpop.permute.xlu0 %271
    %273 = vset.pattern.permute.xlu0 0
    %274 = vperm.xlu0 %273, %v251
    %v275 = vpop.permute.xlu0 %274
    %vm276 = vcmp.eq.s32.totalorder %v254, 1
    %vm277 = vcmp.eq.s32.totalorder %v257, 1
    %vm278 = vcmp.eq.s32.totalorder %v260, 1
    %vm279 = vcmp.eq.s32.totalorder %v263, 1
    %vm280 = vcmp.eq.s32.totalorder %v266, 1
    %vm281 = vcmp.eq.s32.totalorder %v269, 1
    %vm282 = vcmp.eq.s32.totalorder %v272, 1
    %vm283 = vcmp.eq.s32.totalorder %v275, 1
    %v284 = vsel %vm276, %v212, 0.0
    %v285 = vsel %vm277, %v213, 0.0
    %v286 = vsel %vm278, %v214, 0.0
    %v287 = vsel %vm279, %v215, 0.0
    %v288 = vsel %vm280, %v216, 0.0
    %v289 = vsel %vm281, %v217, 0.0
    %v290 = vsel %vm282, %v218, 0.0
    %v291 = vsel %vm283, %v219, 0.0
    %v292 = vsel %vm110, %v284, 0.0
    %v293 = vrot.slane %v292, 4
    %v294 = vadd.f32 %v292, %v293
    %v295 = vrot.slane %v294, 2
    %v296 = vadd.f32 %v294, %v295
    %v297 = vrot.slane %v296, 1
    %v298 = vadd.f32 %v296, %v297
    %v299 = vsel %vm110, %v285, 0.0
    %v300 = vrot.slane %v299, 4
    %v301 = vadd.f32 %v299, %v300
    %v302 = vrot.slane %v301, 2
    %v303 = vadd.f32 %v301, %v302
    %v304 = vrot.slane %v303, 1
    %v305 = vadd.f32 %v303, %v304
    %v306 = vsel %vm110, %v286, 0.0
    %v307 = vrot.slane %v306, 4
    %v308 = vadd.f32 %v306, %v307
    %v309 = vrot.slane %v308, 2
    %v310 = vadd.f32 %v308, %v309
    %v311 = vrot.slane %v310, 1
    %v312 = vadd.f32 %v310, %v311
    %v313 = vsel %vm110, %v287, 0.0
    %v314 = vrot.slane %v313, 4
    %v315 = vadd.f32 %v313, %v314
    %v316 = vrot.slane %v315, 2
    %v317 = vadd.f32 %v315, %v316
    %v318 = vrot.slane %v317, 1
    %v319 = vadd.f32 %v317, %v318
    %v320 = vsel %vm110, %v288, 0.0
    %v321 = vrot.slane %v320, 4
    %v322 = vadd.f32 %v320, %v321
    %v323 = vrot.slane %v322, 2
    %v324 = vadd.f32 %v322, %v323
    %v325 = vrot.slane %v324, 1
    %v326 = vadd.f32 %v324, %v325
    %v327 = vsel %vm110, %v289, 0.0
    %v328 = vrot.slane %v327, 4
    %v329 = vadd.f32 %v327, %v328
    %v330 = vrot.slane %v329, 2
    %v331 = vadd.f32 %v329, %v330
    %v332 = vrot.slane %v331, 1
    %v333 = vadd.f32 %v331, %v332
    %v334 = vsel %vm110, %v290, 0.0
    %v335 = vrot.slane %v334, 4
    %v336 = vadd.f32 %v334, %v335
    %v337 = vrot.slane %v336, 2
    %v338 = vadd.f32 %v336, %v337
    %v339 = vrot.slane %v338, 1
    %v340 = vadd.f32 %v338, %v339
    %v341 = vsel %vm110, %v291, 0.0
    %v342 = vrot.slane %v341, 4
    %v343 = vadd.f32 %v341, %v342
    %v344 = vrot.slane %v343, 2
    %v345 = vadd.f32 %v343, %v344
    %v346 = vrot.slane %v345, 1
    %v347 = vadd.f32 %v345, %v346
    %vm348 = vcmp.gt.s32.totalorder %v220, 1
    %v349 = vsel %vm348, %v220, 1
    %v350 = vcvt.s32.f32 %v349
    %v351 = vrcp.pop %v350
    %v352 = vmul.f32 %v350, %v351
    %v353 = vsub.f32 1.0, %v352
    %v354 = vmul.f32 %v351, %v353
    %v355 = vadd.f32 %v351, %v354
    %vm356 = vweird.f32 %v350
    %vm357 = vweird.f32 %v351
    %vm358 = vmor %vm356, %vm357
    %v359 = vsel %vm358, %v351, %v355
    %v360 = vand.u32 2147483647, %v350
    %vm361 = vcmp.eq.f32.partialorder %v360, 8.507059e+37
    %v362 = vand.u32 %v350, 2147483648
    %v363 = vor.u32 1.1754944e-38, %v362
    %v364 = vsel %vm361, %v363, %v359
    %366 = vset.pattern.permute.xlu0 0
    %367 = vperm.xlu0 %366, %v364
    %v368 = vpop.permute.xlu0 %367
    %v369 = vrot.slane %v368, 1
    %v370 = vrot.slane %v368, 2
    %v371 = vrot.slane %v368, 3
    %v372 = vrot.slane %v368, 4
    %v373 = vrot.slane %v368, 5
    %v374 = vrot.slane %v368, 6
    %v375 = vrot.slane %v368, 7
    %v384 = vmul.f32 %v298, %v368
    %v385 = vmul.f32 %v305, %v369
    %v386 = vmul.f32 %v312, %v370
    %v387 = vmul.f32 %v319, %v371
    %v388 = vmul.f32 %v326, %v372
    %v389 = vmul.f32 %v333, %v373
    %v390 = vmul.f32 %v340, %v374
    %v391 = vmul.f32 %v347, %v375
    %s392 = scalar_lea.vmem [#allocation2], 128
    %v393 = vld [vmem:[%s392] sm:$0xff]
    %v394 = vld [vmem:[%s392 + $0x8] sm:$0xff]
    %v395 = vld [vmem:[%s392 + $0x10] sm:$0xff]
    %v396 = vld [vmem:[%s392 + $0x18] sm:$0xff]
    %v397 = vld [vmem:[%s392 + $0x20] sm:$0xff]
    %v398 = vld [vmem:[%s392 + $0x28] sm:$0xff]
    %v399 = vld [vmem:[%s392 + $0x30] sm:$0xff]
    %v400 = vld [vmem:[%s392 + $0x38] sm:$0xff]
    %v401 = vld [vmem:[%s1 + $0x10] sm:$0xff]
    %v402 = vrot.slane %v401, 1
    %v403 = vrot.slane %v401, 2
    %v404 = vrot.slane %v401, 3
    %v405 = vrot.slane %v401, 4
    %v406 = vrot.slane %v401, 5
    %v407 = vrot.slane %v401, 6
    %v408 = vrot.slane %v401, 7
    %v409 = vperm.slane %v401, 0
    %v410 = vperm.slane %v402, 0
    %v411 = vperm.slane %v403, 0
    %v412 = vperm.slane %v404, 0
    %v413 = vperm.slane %v405, 0
    %v414 = vperm.slane %v406, 0
    %v415 = vperm.slane %v407, 0
    %v416 = vperm.slane %v408, 0
    %vm417 = vcmp.lt.s32.totalorder %v29, %v409
    %vm418 = vcmp.lt.s32.totalorder %v29, %v410
    %vm419 = vcmp.lt.s32.totalorder %v29, %v411
    %vm420 = vcmp.lt.s32.totalorder %v29, %v412
    %vm421 = vcmp.lt.s32.totalorder %v29, %v413
    %vm422 = vcmp.lt.s32.totalorder %v29, %v414
    %vm423 = vcmp.lt.s32.totalorder %v29, %v415
    %vm424 = vcmp.lt.s32.totalorder %v29, %v416
    %v425 = vsel %vm417, 1, 0
    %v426 = vsel %vm418, 1, 0
    %v427 = vsel %vm419, 1, 0
    %v428 = vsel %vm420, 1, 0
    %v429 = vsel %vm421, 1, 0
    %v430 = vsel %vm422, 1, 0
    %v431 = vsel %vm423, 1, 0
    %v432 = vsel %vm424, 1, 0
    %433 = vset.pattern.permute.xlu0 0
    %434 = vperm.xlu0 %433, %v425
    %v435 = vpop.permute.xlu0 %434
    %436 = vset.pattern.permute.xlu0 0
    %437 = vperm.xlu0 %436, %v426
    %v438 = vpop.permute.xlu0 %437
    %439 = vset.pattern.permute.xlu0 0
    %440 = vperm.xlu0 %439, %v427
    %v441 = vpop.permute.xlu0 %440
    %442 = vset.pattern.permute.xlu0 0
    %443 = vperm.xlu0 %442, %v428
    %v444 = vpop.permute.xlu0 %443
    %445 = vset.pattern.permute.xlu0 0
    %446 = vperm.xlu0 %445, %v429
    %v447 = vpop.permute.xlu0 %446
    %448 = vset.pattern.permute.xlu0 0
    %449 = vperm.xlu0 %448, %v430
    %v450 = vpop.permute.xlu0 %449
    %451 = vset.pattern.permute.xlu0 0
    %452 = vperm.xlu0 %451, %v431
    %v453 = vpop.permute.xlu0 %452
    %454 = vset.pattern.permute.xlu0 0
    %455 = vperm.xlu0 %454, %v432
    %v456 = vpop.permute.xlu0 %455
    %vm457 = vcmp.eq.s32.totalorder %v435, 1
    %vm458 = vcmp.eq.s32.totalorder %v438, 1
    %vm459 = vcmp.eq.s32.totalorder %v441, 1
    %vm460 = vcmp.eq.s32.totalorder %v444, 1
    %vm461 = vcmp.eq.s32.totalorder %v447, 1
    %vm462 = vcmp.eq.s32.totalorder %v450, 1
    %vm463 = vcmp.eq.s32.totalorder %v453, 1
    %vm464 = vcmp.eq.s32.totalorder %v456, 1
    %v465 = vsel %vm457, %v393, 0.0
    %v466 = vsel %vm458, %v394, 0.0
    %v467 = vsel %vm459, %v395, 0.0
    %v468 = vsel %vm460, %v396, 0.0
    %v469 = vsel %vm461, %v397, 0.0
    %v470 = vsel %vm462, %v398, 0.0
    %v471 = vsel %vm463, %v399, 0.0
    %v472 = vsel %vm464, %v400, 0.0
    %v473 = vsel %vm110, %v465, 0.0
    %v474 = vrot.slane %v473, 4
    %v475 = vadd.f32 %v473, %v474
    %v476 = vrot.slane %v475, 2
    %v477 = vadd.f32 %v475, %v476
    %v478 = vrot.slane %v477, 1
    %v479 = vadd.f32 %v477, %v478
    %v480 = vsel %vm110, %v466, 0.0
    %v481 = vrot.slane %v480, 4
    %v482 = vadd.f32 %v480, %v481
    %v483 = vrot.slane %v482, 2
    %v484 = vadd.f32 %v482, %v483
    %v485 = vrot.slane %v484, 1
    %v486 = vadd.f32 %v484, %v485
    %v487 = vsel %vm110, %v467, 0.0
    %v488 = vrot.slane %v487, 4
    %v489 = vadd.f32 %v487, %v488
    %v490 = vrot.slane %v489, 2
    %v491 = vadd.f32 %v489, %v490
    %v492 = vrot.slane %v491, 1
    %v493 = vadd.f32 %v491, %v492
    %v494 = vsel %vm110, %v468, 0.0
    %v495 = vrot.slane %v494, 4
    %v496 = vadd.f32 %v494, %v495
    %v497 = vrot.slane %v496, 2
    %v498 = vadd.f32 %v496, %v497
    %v499 = vrot.slane %v498, 1
    %v500 = vadd.f32 %v498, %v499
    %v501 = vsel %vm110, %v469, 0.0
    %v502 = vrot.slane %v501, 4
    %v503 = vadd.f32 %v501, %v502
    %v504 = vrot.slane %v503, 2
    %v505 = vadd.f32 %v503, %v504
    %v506 = vrot.slane %v505, 1
    %v507 = vadd.f32 %v505, %v506
    %v508 = vsel %vm110, %v470, 0.0
    %v509 = vrot.slane %v508, 4
    %v510 = vadd.f32 %v508, %v509
    %v511 = vrot.slane %v510, 2
    %v512 = vadd.f32 %v510, %v511
    %v513 = vrot.slane %v512, 1
    %v514 = vadd.f32 %v512, %v513
    %v515 = vsel %vm110, %v471, 0.0
    %v516 = vrot.slane %v515, 4
    %v517 = vadd.f32 %v515, %v516
    %v518 = vrot.slane %v517, 2
    %v519 = vadd.f32 %v517, %v518
    %v520 = vrot.slane %v519, 1
    %v521 = vadd.f32 %v519, %v520
    %v522 = vsel %vm110, %v472, 0.0
    %v523 = vrot.slane %v522, 4
    %v524 = vadd.f32 %v522, %v523
    %v525 = vrot.slane %v524, 2
    %v526 = vadd.f32 %v524, %v525
    %v527 = vrot.slane %v526, 1
    %v528 = vadd.f32 %v526, %v527
    %vm529 = vcmp.gt.s32.totalorder %v401, 1
    %v530 = vsel %vm529, %v401, 1
    %v531 = vcvt.s32.f32 %v530
    %v532 = vrcp.pop %v531
    %v533 = vmul.f32 %v531, %v532
    %v534 = vsub.f32 1.0, %v533
    %v535 = vmul.f32 %v532, %v534
    %v536 = vadd.f32 %v532, %v535
    %vm537 = vweird.f32 %v531
    %vm538 = vweird.f32 %v532
    %vm539 = vmor %vm537, %vm538
    %v540 = vsel %vm539, %v532, %v536
    %v541 = vand.u32 2147483647, %v531
    %vm542 = vcmp.eq.f32.partialorder %v541, 8.507059e+37
    %v543 = vand.u32 %v531, 2147483648
    %v544 = vor.u32 1.1754944e-38, %v543
    %v545 = vsel %vm542, %v544, %v540
    %547 = vset.pattern.permute.xlu0 0
    %548 = vperm.xlu0 %547, %v545
    %v549 = vpop.permute.xlu0 %548
    %v550 = vrot.slane %v549, 1
    %v551 = vrot.slane %v549, 2
    %v552 = vrot.slane %v549, 3
    %v553 = vrot.slane %v549, 4
    %v554 = vrot.slane %v549, 5
    %v555 = vrot.slane %v549, 6
    %v556 = vrot.slane %v549, 7
    %v565 = vmul.f32 %v479, %v549
    %v566 = vmul.f32 %v486, %v550
    %v567 = vmul.f32 %v493, %v551
    %v568 = vmul.f32 %v500, %v552
    %v569 = vmul.f32 %v507, %v553
    %v570 = vmul.f32 %v514, %v554
    %v571 = vmul.f32 %v521, %v555
    %v572 = vmul.f32 %v528, %v556
    %s573 = scalar_lea.vmem [#allocation2], 192
    %v574 = vld [vmem:[%s573] sm:$0xff]
    %v575 = vld [vmem:[%s573 + $0x8] sm:$0xff]
    %v576 = vld [vmem:[%s573 + $0x10] sm:$0xff]
    %v577 = vld [vmem:[%s573 + $0x18] sm:$0xff]
    %v578 = vld [vmem:[%s573 + $0x20] sm:$0xff]
    %v579 = vld [vmem:[%s573 + $0x28] sm:$0xff]
    %v580 = vld [vmem:[%s573 + $0x30] sm:$0xff]
    %v581 = vld [vmem:[%s573 + $0x38] sm:$0xff]
    %v582 = vld [vmem:[%s1 + $0x18] sm:$0xff]
    %v583 = vrot.slane %v582, 1
    %v584 = vrot.slane %v582, 2
    %v585 = vrot.slane %v582, 3
    %v586 = vrot.slane %v582, 4
    %v587 = vrot.slane %v582, 5
    %v588 = vrot.slane %v582, 6
    %v589 = vrot.slane %v582, 7
    %v590 = vperm.slane %v582, 0
    %v591 = vperm.slane %v583, 0
    %v592 = vperm.slane %v584, 0
    %v593 = vperm.slane %v585, 0
    %v594 = vperm.slane %v586, 0
    %v595 = vperm.slane %v587, 0
    %v596 = vperm.slane %v588, 0
    %v597 = vperm.slane %v589, 0
    %vm598 = vcmp.lt.s32.totalorder %v29, %v590
    %vm599 = vcmp.lt.s32.totalorder %v29, %v591
    %vm600 = vcmp.lt.s32.totalorder %v29, %v592
    %vm601 = vcmp.lt.s32.totalorder %v29, %v593
    %vm602 = vcmp.lt.s32.totalorder %v29, %v594
    %vm603 = vcmp.lt.s32.totalorder %v29, %v595
    %vm604 = vcmp.lt.s32.totalorder %v29, %v596
    %vm605 = vcmp.lt.s32.totalorder %v29, %v597
    %v606 = vsel %vm598, 1, 0
    %v607 = vsel %vm599, 1, 0
    %v608 = vsel %vm600, 1, 0
    %v609 = vsel %vm601, 1, 0
    %v610 = vsel %vm602, 1, 0
    %v611 = vsel %vm603, 1, 0
    %v612 = vsel %vm604, 1, 0
    %v613 = vsel %vm605, 1, 0
    %614 = vset.pattern.permute.xlu0 0
    %615 = vperm.xlu0 %614, %v606
    %v616 = vpop.permute.xlu0 %615
    %617 = vset.pattern.permute.xlu0 0
    %618 = vperm.xlu0 %617, %v607
    %v619 = vpop.permute.xlu0 %618
    %620 = vset.pattern.permute.xlu0 0
    %621 = vperm.xlu0 %620, %v608
    %v622 = vpop.permute.xlu0 %621
    %623 = vset.pattern.permute.xlu0 0
    %624 = vperm.xlu0 %623, %v609
    %v625 = vpop.permute.xlu0 %624
    %626 = vset.pattern.permute.xlu0 0
    %627 = vperm.xlu0 %626, %v610
    %v628 = vpop.permute.xlu0 %627
    %629 = vset.pattern.permute.xlu0 0
    %630 = vperm.xlu0 %629, %v611
    %v631 = vpop.permute.xlu0 %630
    %632 = vset.pattern.permute.xlu0 0
    %633 = vperm.xlu0 %632, %v612
    %v634 = vpop.permute.xlu0 %633
    %635 = vset.pattern.permute.xlu0 0
    %636 = vperm.xlu0 %635, %v613
    %v637 = vpop.permute.xlu0 %636
    %vm638 = vcmp.eq.s32.totalorder %v616, 1
    %vm639 = vcmp.eq.s32.totalorder %v619, 1
    %vm640 = vcmp.eq.s32.totalorder %v622, 1
    %vm641 = vcmp.eq.s32.totalorder %v625, 1
    %vm642 = vcmp.eq.s32.totalorder %v628, 1
    %vm643 = vcmp.eq.s32.totalorder %v631, 1
    %vm644 = vcmp.eq.s32.totalorder %v634, 1
    %vm645 = vcmp.eq.s32.totalorder %v637, 1
    %v646 = vsel %vm638, %v574, 0.0
    %v647 = vsel %vm639, %v575, 0.0
    %v648 = vsel %vm640, %v576, 0.0
    %v649 = vsel %vm641, %v577, 0.0
    %v650 = vsel %vm642, %v578, 0.0
    %v651 = vsel %vm643, %v579, 0.0
    %v652 = vsel %vm644, %v580, 0.0
    %v653 = vsel %vm645, %v581, 0.0
    %v654 = vsel %vm110, %v646, 0.0
    %v655 = vrot.slane %v654, 4
    %v656 = vadd.f32 %v654, %v655
    %v657 = vrot.slane %v656, 2
    %v658 = vadd.f32 %v656, %v657
    %v659 = vrot.slane %v658, 1
    %v660 = vadd.f32 %v658, %v659
    %v661 = vsel %vm110, %v647, 0.0
    %v662 = vrot.slane %v661, 4
    %v663 = vadd.f32 %v661, %v662
    %v664 = vrot.slane %v663, 2
    %v665 = vadd.f32 %v663, %v664
    %v666 = vrot.slane %v665, 1
    %v667 = vadd.f32 %v665, %v666
    %v668 = vsel %vm110, %v648, 0.0
    %v669 = vrot.slane %v668, 4
    %v670 = vadd.f32 %v668, %v669
    %v671 = vrot.slane %v670, 2
    %v672 = vadd.f32 %v670, %v671
    %v673 = vrot.slane %v672, 1
    %v674 = vadd.f32 %v672, %v673
    %v675 = vsel %vm110, %v649, 0.0
    %v676 = vrot.slane %v675, 4
    %v677 = vadd.f32 %v675, %v676
    %v678 = vrot.slane %v677, 2
    %v679 = vadd.f32 %v677, %v678
    %v680 = vrot.slane %v679, 1
    %v681 = vadd.f32 %v679, %v680
    %v682 = vsel %vm110, %v650, 0.0
    %v683 = vrot.slane %v682, 4
    %v684 = vadd.f32 %v682, %v683
    %v685 = vrot.slane %v684, 2
    %v686 = vadd.f32 %v684, %v685
    %v687 = vrot.slane %v686, 1
    %v688 = vadd.f32 %v686, %v687
    %v689 = vsel %vm110, %v651, 0.0
    %v690 = vrot.slane %v689, 4
    %v691 = vadd.f32 %v689, %v690
    %v692 = vrot.slane %v691, 2
    %v693 = vadd.f32 %v691, %v692
    %v694 = vrot.slane %v693, 1
    %v695 = vadd.f32 %v693, %v694
    %v696 = vsel %vm110, %v652, 0.0
    %v697 = vrot.slane %v696, 4
    %v698 = vadd.f32 %v696, %v697
    %v699 = vrot.slane %v698, 2
    %v700 = vadd.f32 %v698, %v699
    %v701 = vrot.slane %v700, 1
    %v702 = vadd.f32 %v700, %v701
    %v703 = vsel %vm110, %v653, 0.0
    %v704 = vrot.slane %v703, 4
    %v705 = vadd.f32 %v703, %v704
    %v706 = vrot.slane %v705, 2
    %v707 = vadd.f32 %v705, %v706
    %v708 = vrot.slane %v707, 1
    %v709 = vadd.f32 %v707, %v708
    %vm710 = vcmp.gt.s32.totalorder %v582, 1
    %v711 = vsel %vm710, %v582, 1
    %v712 = vcvt.s32.f32 %v711
    %v713 = vrcp.pop %v712
    %v714 = vmul.f32 %v712, %v713
    %v715 = vsub.f32 1.0, %v714
    %v716 = vmul.f32 %v713, %v715
    %v717 = vadd.f32 %v713, %v716
    %vm718 = vweird.f32 %v712
    %vm719 = vweird.f32 %v713
    %vm720 = vmor %vm718, %vm719
    %v721 = vsel %vm720, %v713, %v717
    %v722 = vand.u32 2147483647, %v712
    %vm723 = vcmp.eq.f32.partialorder %v722, 8.507059e+37
    %v724 = vand.u32 %v712, 2147483648
    %v725 = vor.u32 1.1754944e-38, %v724
    %v726 = vsel %vm723, %v725, %v721
    %728 = vset.pattern.permute.xlu0 0
    %729 = vperm.xlu0 %728, %v726
    %v730 = vpop.permute.xlu0 %729
    %v731 = vrot.slane %v730, 1
    %v732 = vrot.slane %v730, 2
    %v733 = vrot.slane %v730, 3
    %v734 = vrot.slane %v730, 4
    %v735 = vrot.slane %v730, 5
    %v736 = vrot.slane %v730, 6
    %v737 = vrot.slane %v730, 7
    %v746 = vmul.f32 %v660, %v730
    %v747 = vmul.f32 %v667, %v731
    %v748 = vmul.f32 %v674, %v732
    %v749 = vmul.f32 %v681, %v733
    %v750 = vmul.f32 %v688, %v734
    %v751 = vmul.f32 %v695, %v735
    %v752 = vmul.f32 %v702, %v736
    %v753 = vmul.f32 %v709, %v737
    %v762 = vrot.slane %v204, 7
    %vm763 = vcmask 1041409
    %v764 = vsel %vm763, %v762, %v203
    %v765 = vrot.slane %v205, 6
    %vm766 = vcmask 1042434
    %v767 = vsel %vm766, %v765, %v764
    %v768 = vrot.slane %v206, 5
    %vm769 = vcmask 1043459
    %v770 = vsel %vm769, %v768, %v767
    %v771 = vrot.slane %v207, 4
    %vm772 = vcmask 1044484
    %v773 = vsel %vm772, %v771, %v770
    %v774 = vrot.slane %v208, 3
    %vm775 = vcmask 1045509
    %v776 = vsel %vm775, %v774, %v773
    %v777 = vrot.slane %v209, 2
    %vm778 = vcmask 1046534
    %v779 = vsel %vm778, %v777, %v776
    %v780 = vrot.slane %v210, 1
    %vm781 = vcmask 1047559
    %v782 = vsel %vm781, %v780, %v779
    %v792 = vrot.slane %v385, 7
    %v793 = vsel %vm763, %v792, %v384
    %v794 = vrot.slane %v386, 6
    %v795 = vsel %vm766, %v794, %v793
    %v796 = vrot.slane %v387, 5
    %v797 = vsel %vm769, %v796, %v795
    %v798 = vrot.slane %v388, 4
    %v799 = vsel %vm772, %v798, %v797
    %v800 = vrot.slane %v389, 3
    %v801 = vsel %vm775, %v800, %v799
    %v802 = vrot.slane %v390, 2
    %v803 = vsel %vm778, %v802, %v801
    %v804 = vrot.slane %v391, 1
    %v805 = vsel %vm781, %v804, %v803
    %806 = vrot.lane.b32.xlu0 %v805, 32
    %v807 = vpop.permute.xlu0 %806
    %v817 = vrot.slane %v566, 7
    %v818 = vsel %vm763, %v817, %v565
    %v819 = vrot.slane %v567, 6
    %v820 = vsel %vm766, %v819, %v818
    %v821 = vrot.slane %v568, 5
    %v822 = vsel %vm769, %v821, %v820
    %v823 = vrot.slane %v569, 4
    %v824 = vsel %vm772, %v823, %v822
    %v825 = vrot.slane %v570, 3
    %v826 = vsel %vm775, %v825, %v824
    %v827 = vrot.slane %v571, 2
    %v828 = vsel %vm778, %v827, %v826
    %v829 = vrot.slane %v572, 1
    %v830 = vsel %vm781, %v829, %v828
    %831 = vrot.lane.b32.xlu0 %v830, 64
    %v832 = vpop.permute.xlu0 %831
    %v842 = vrot.slane %v747, 7
    %v843 = vsel %vm763, %v842, %v746
    %v844 = vrot.slane %v748, 6
    %v845 = vsel %vm766, %v844, %v843
    %v846 = vrot.slane %v749, 5
    %v847 = vsel %vm769, %v846, %v845
    %v848 = vrot.slane %v750, 4
    %v849 = vsel %vm772, %v848, %v847
    %v850 = vrot.slane %v751, 3
    %v851 = vsel %vm775, %v850, %v849
    %v852 = vrot.slane %v752, 2
    %v853 = vsel %vm778, %v852, %v851
    %v854 = vrot.slane %v753, 1
    %v855 = vsel %vm781, %v854, %v853
    %856 = vrot.lane.b32.xlu0 %v855, 96
    %v857 = vpop.permute.xlu0 %856
    %v859 = vsel %vm110, %v782, %v807
    %vm860 = vcmask 523264
    %v861 = vsel %vm860, %v859, %v832
    %vm862 = vcmask 785408
    %v863 = vsel %vm862, %v861, %v857
    %864 = vst [vmem:[#allocation5] sm:$0xff] %v863
    // Predicated region
    $region14: #{tpu_custom_call.1} parent=1 // pred_check
      _
    $region15: #{tpu_custom_call.1} parent=1 // pred_check_branch
      %866 = sbr.rel (0) target = $region17
    $region16: #{tpu_custom_call.1} parent=1 // pred_region
      %868 = vsyncadd [#allocation4], 0
      %s870 = sshll.u32 [#allocation5], 4
      %s871 = int_to_ptr.vmem [resolvable:$true] %s870
      %s872 = sshll.u32 %s2, 4
      %s873 = int_to_ptr.hbm [resolvable:$true] %s872
      %875 = dma.vmem_to_hbm [thread:$0]  %s871, 128, %s873, [#allocation4]
    $region17: #{tpu_custom_call.1} parent=1 // pred_fallthru
      _
    // Predicated region
    $region18: #{tpu_custom_call.1} parent=1 // pred_check
      _
    $region19: #{tpu_custom_call.1} parent=1 // pred_check_branch
      %877 = sbr.rel (0) target = $region21
    $region20: #{tpu_custom_call.1} parent=1 // pred_region
      %879 = dma.done [#allocation4], 128
    $region21: #{tpu_custom_call.1} parent=1 // pred_fallthru
      _
    %880 = vsyncpa [#allocation3], 1
    %881 = vsyncpa [#allocation4], 1

</llo_original>
